<compile_context>
chip_gen: v7x
topology: tpu7x:2x2x1
jax: 0.10.0
libtpu: 0.0.40
codegen_flags: <defaults>
</compile_context>

<pallas_src>
import math

import jax
import jax.numpy as jnp
from jax import lax
from jax.experimental import pallas as pl
from jax.experimental.pallas import tpu as pltpu


# ---------------------------------------------------------------------------
# Kernel
# ---------------------------------------------------------------------------
def _mlp_kernel(x_ref, m_ref,
                w1x_ref, w1m_ref, b1_ref,
                w2_ref, b2_ref,
                w3_ref, b3_ref,
                o_ref):
    """One batch tile of the fused MLP (eval-mode BN folded into W/b)."""
    # Layer 1: x @ W1_x on the MXU. Cast to the weight dtype in-register
    # (free VPU cast; no wrapper-side HBM conversion pass), accumulate in f32.
    h1 = jnp.dot(x_ref[...].astype(w1x_ref.dtype), w1x_ref[...],
                 preferred_element_type=jnp.float32)

    # Mono-score column: the (1, tile) lane-dense block is transposed to a
    # (tile, 1) column (XLU, plenty of slack) and applied as a VPU broadcast
    # multiply-add against the folded W1 mono row.
    m_col = jnp.transpose(m_ref[...]).astype(jnp.float32)          # (tile, 1)
    h1 = jnp.maximum(h1 + m_col * w1m_ref[...] + b1_ref[...], 0.0)

    # Layer 2: Linear -> ReLU (matmul in weight dtype, f32 accum/elementwise).
    h2 = jnp.dot(h1.astype(w2_ref.dtype), w2_ref[...],
                 preferred_element_type=jnp.float32)
    h2 = jnp.maximum(h2 + b2_ref[...], 0.0)

    # Head Linear(32 -> 1): contract each row's 32 features against the w3
    # row, producing the (1, tile) lane-dense layout of o_ref directly
    # (avoids a lane-sparse (tile, 1) store).
    out = lax.dot_general(w3_ref[...], h2,
                          dimension_numbers=(((1,), (1,)), ((), ())),
                          preferred_element_type=jnp.float32)       # (1, tile)
    o_ref[...] = out + b3_ref[...]


# ---------------------------------------------------------------------------
# Wrapper
# ---------------------------------------------------------------------------
def _round_up(n, m):
    return ((n + m - 1) // m) * m


def enhanced_model_forward(x, mono_scores, folded_params, *, tile_b=2048):
    """x: (B, input_dim), mono_scores: (B,) -> (B, 1) float32.

    Matmul precision follows the dtype of the folded weights (w1x / w2); the
    activation casts happen inside the kernel. No padding copies of x/mono are
    made: the last grid step uses a partial block.
    """
    w1x, w1m, b1, w2, b2, w3, b3 = folded_params
    B, input_dim = x.shape

    # Batch tile: multiple of 128 so the mono/output blocks are lane-dense.
    tile = max(128, min(_round_up(tile_b, 128), _round_up(B, 128)))
    # v7x megacore: split a large batch over >= 2 grid steps so the
    # "parallel" axis feeds both TensorCores.
    if B > 128 and pl.cdiv(B, tile) < 2:
        tile = max(128, _round_up(pl.cdiv(B, 2), 128))
    grid = pl.cdiv(B, tile)

    mono_2d = mono_scores.reshape(1, B)   # free view of the contiguous vector

    def const_spec(arr):  # weights/biases stay resident across the whole grid
        return pl.BlockSpec(arr.shape, lambda i: (0, 0))

    out = pl.pallas_call(
        _mlp_kernel,
        out_shape=jax.ShapeDtypeStruct((1, B), jnp.float32),
        grid=(grid,),
        in_specs=[
            pl.BlockSpec((tile, input_dim), lambda i: (i, 0)),   # x rows
            pl.BlockSpec((1, tile), lambda i: (0, i)),           # mono (lane-dense)
            const_spec(w1x), const_spec(w1m), const_spec(b1),
            const_spec(w2), const_spec(b2),
            const_spec(w3), const_spec(b3),
        ],
        out_specs=pl.BlockSpec((1, tile), lambda i: (0, i)),     # lane-dense out
        compiler_params=pltpu.CompilerParams(
            dimension_semantics=("parallel",)),                  # megacore on v7x
    )(x, mono_2d, w1x, w1m, b1, w2, b2, w3, b3)

    return out.reshape(B, 1)   # metadata-only reshape of the (1, B) row


# ---------------------------------------------------------------------------
# Parameters (PyTorch-default-style init) + BN folding
# ---------------------------------------------------------------------------
def make_params(key, input_dim, hidden_dims=(64, 32)):
    """Raw params mimicking PyTorch defaults: Kaiming-uniform Linear, BN with
    gamma=1, beta=0, running_mean=0, running_var=1."""
    dims = [input_dim + 1] + list(hidden_dims) + [1]
    keys = jax.random.split(key, 2 * (len(dims) - 1))

    def linear(kw, kb, fan_in, fan_out):
        bound = 1.0 / math.sqrt(fan_in)
        w = jax.random.uniform(kw, (fan_in, fan_out), jnp.float32, -bound, bound)
        b = jax.random.uniform(kb, (fan_out,), jnp.float32, -bound, bound)
        return w, b

    w1, b1 = linear(keys[0], keys[1], dims[0], dims[1])
    w2, b2 = linear(keys[2], keys[3], dims[1], dims[2])
    w3, b3 = linear(keys[4], keys[5], dims[2], dims[3])

    def bn(n):
        return dict(gamma=jnp.ones((n,), jnp.float32),
                    beta=jnp.zeros((n,), jnp.float32),
                    mean=jnp.zeros((n,), jnp.float32),
                    var=jnp.ones((n,), jnp.float32))

    return dict(w1=w1, b1=b1, bn1=bn(dims[1]),
                w2=w2, b2=b2, bn2=bn(dims[2]),
                w3=w3, b3=b3)


def fold_params(raw, input_dim, eps=1e-5, compute_dtype=jnp.float32):
    """Fold eval-mode BatchNorm into the Linear weights/biases, split W1 into
    the x-part and the mono-score row, and cast the MXU weights to
    `compute_dtype` (biases, mono row and the tiny head stay f32)."""
    def fold(w, b, bn):
        scale = bn["gamma"] / jnp.sqrt(bn["var"] + eps)
        shift = bn["beta"] - bn["mean"] * scale
        return w * scale[None, :], b * scale + shift

    w1f, b1f = fold(raw["w1"], raw["b1"], raw["bn1"])
    w2f, b2f = fold(raw["w2"], raw["b2"], raw["bn2"])

    w1x = w1f[:input_dim].astype(compute_dtype)              # (input_dim, 64)
    w1m = w1f[input_dim:input_dim + 1].astype(jnp.float32)   # (1, 64)  VPU-only
    b1r = b1f[None, :].astype(jnp.float32)                   # (1, 64)
    w2c = w2f.astype(compute_dtype)                          # (64, 32)
    b2r = b2f[None, :].astype(jnp.float32)                   # (1, 32)
    w3r = raw["w3"].T.astype(jnp.float32)                    # (1, 32)
    b3r = raw["b3"][None, :].astype(jnp.float32)             # (1, 1)
    return (w1x, w1m, b1r, w2c, b2r, w3r, b3r)


def reference_forward(x, mono_scores, raw, eps=1e-5):
    """Pure-JAX eval-mode reference (explicit BN) for correctness checking."""
    h = jnp.concatenate([x, mono_scores[:, None]], axis=1)

    def block(h, w, b, bn):
        h = h @ w + b
        h = (h - bn["mean"]) / jnp.sqrt(bn["var"] + eps) * bn["gamma"] + bn["beta"]
        return jnp.maximum(h, 0.0)

    h = block(h, raw["w1"], raw["b1"], raw["bn1"])
    h = block(h, raw["w2"], raw["b2"], raw["bn2"])
    return h @ raw["w3"] + raw["b3"]


# ---------------------------------------------------------------------------
# Demo / correctness checks
# ---------------------------------------------------------------------------
if __name__ == "__main__":
    key = jax.random.PRNGKey(0)
    k_param, k_x, k_m, k_x2, k_m2 = jax.random.split(key, 5)

    input_dim = 16
    raw = make_params(k_param, input_dim)
    folded_f32 = fold_params(raw, input_dim, compute_dtype=jnp.float32)

    # --- small batch: single (partial) tile, strict f32 check ----------------
    B = 8
    x = jax.random.normal(k_x, (B, input_dim), jnp.float32)
    mono = jax.random.uniform(k_m, (B,), jnp.float32, -1.0, 1.0)
    out = jax.block_until_ready(enhanced_model_forward(x, mono, folded_f32))
    ref = reference_forward(x, mono, raw)
    assert out.shape == (B, 1), out.shape
    assert jnp.allclose(out, ref, atol=1e-5, rtol=1e-5), (out, ref)

    # --- larger batch, not a multiple of the tile: multi-step grid + partial
    #     last block (default tile_b path, incl. the >=2-step megacore clamp) --
    B2 = 300
    x2 = jax.random.normal(k_x2, (B2, input_dim), jnp.float32)
    mono2 = jax.random.uniform(k_m2, (B2,), jnp.float32, -1.0, 1.0)
    out2 = jax.block_until_ready(enhanced_model_forward(x2, mono2, folded_f32))
    ref2 = reference_forward(x2, mono2, raw)
    assert out2.shape == (B2, 1), out2.shape
    assert jnp.allclose(out2, ref2, atol=1e-5, rtol=1e-5)

    # --- bf16 matmul weights, in-kernel activation cast, f32 accumulation ----
    folded_bf16 = fold_params(raw, input_dim, compute_dtype=jnp.bfloat16)
    out3 = jax.block_until_ready(
        enhanced_model_forward(x2, mono2, folded_bf16, tile_b=128))
    assert out3.shape == (B2, 1), out3.shape
    assert jnp.allclose(out3, ref2, atol=5e-2, rtol=5e-2)

    print("KERNEL_OK")
</pallas_src>

<mosaic_0001>
module attributes {stable_mosaic.version = 11 : i64} {
  func.func @_mlp_kernel(%arg0: i32, %arg1: memref<128x16xf32, #tpu.memory_space<vmem>>, %arg2: memref<1x128xf32, #tpu.memory_space<vmem>>, %arg3: memref<16x64xf32, #tpu.memory_space<vmem>>, %arg4: memref<1x64xf32, #tpu.memory_space<vmem>>, %arg5: memref<1x64xf32, #tpu.memory_space<vmem>>, %arg6: memref<64x32xf32, #tpu.memory_space<vmem>>, %arg7: memref<1x32xf32, #tpu.memory_space<vmem>>, %arg8: memref<1x32xf32, #tpu.memory_space<vmem>>, %arg9: memref<1x1xf32, #tpu.memory_space<vmem>>, %arg10: memref<1x128xf32, #tpu.memory_space<vmem>>) attributes {dimension_semantics = [#tpu.dimension_semantics<parallel>], iteration_bounds = array<i64: 1>, scalar_prefetch = 0 : i64, scratch_operands = 0 : i64, tpu.core_type = #tpu.core_type<tc>, window_params = [{transform_indices = @transform_0, window_bounds = array<i64: 128, 16>}, {transform_indices = @transform_1, window_bounds = array<i64: 1, 128>}, {pipeline_mode = #tpu.pipeline_mode<synchronous>, transform_indices = @transform_2, window_bounds = array<i64: 16, 64>}, {pipeline_mode = #tpu.pipeline_mode<synchronous>, transform_indices = @transform_3, window_bounds = array<i64: 1, 64>}, {pipeline_mode = #tpu.pipeline_mode<synchronous>, transform_indices = @transform_4, window_bounds = array<i64: 1, 64>}, {pipeline_mode = #tpu.pipeline_mode<synchronous>, transform_indices = @transform_5, window_bounds = array<i64: 64, 32>}, {pipeline_mode = #tpu.pipeline_mode<synchronous>, transform_indices = @transform_6, window_bounds = array<i64: 1, 32>}, {pipeline_mode = #tpu.pipeline_mode<synchronous>, transform_indices = @transform_7, window_bounds = array<i64: 1, 32>}, {pipeline_mode = #tpu.pipeline_mode<synchronous>, transform_indices = @transform_8, window_bounds = array<i64: 1, 1>}, {transform_indices = @transform_9, window_bounds = array<i64: 1, 128>}]} {
    %c0 = arith.constant 0 : index
    %c0_0 = arith.constant 0 : index
    %0 = vector.load %arg1[%c0, %c0_0] : memref<128x16xf32, #tpu.memory_space<vmem>>, vector<128x16xf32>
    %c0_1 = arith.constant 0 : index
    %c0_2 = arith.constant 0 : index
    %1 = vector.load %arg3[%c0_1, %c0_2] : memref<16x64xf32, #tpu.memory_space<vmem>>, vector<16x64xf32>
    %cst = arith.constant dense<0.000000e+00> : vector<128x64xf32>
    %2 = tpu.matmul %0, %1, %cst {dimension_numbers = #tpu.dot_dimension_numbers<[1], [0], [0], [1], [0, 0, 1, 1], [], []>} : vector<128x16xf32>, vector<16x64xf32>, vector<128x64xf32> -> vector<128x64xf32>
    %c0_3 = arith.constant 0 : index
    %c0_4 = arith.constant 0 : index
    %3 = vector.load %arg2[%c0_3, %c0_4] : memref<1x128xf32, #tpu.memory_space<vmem>>, vector<1x128xf32>
    %4 = tpu.transpose %3, [1, 0] : vector<1x128xf32> -> vector<128x1xf32>
    %c0_5 = arith.constant 0 : index
    %c0_6 = arith.constant 0 : index
    %5 = vector.load %arg4[%c0_5, %c0_6] : memref<1x64xf32, #tpu.memory_space<vmem>>, vector<1x64xf32>
    %6 = vector.broadcast %4 : vector<128x1xf32> to vector<128x64xf32>
    %7 = vector.broadcast %5 : vector<1x64xf32> to vector<128x64xf32>
    %8 = arith.mulf %6, %7 : vector<128x64xf32>
    %9 = arith.addf %2, %8 : vector<128x64xf32>
    %c0_7 = arith.constant 0 : index
    %c0_8 = arith.constant 0 : index
    %10 = vector.load %arg5[%c0_7, %c0_8] : memref<1x64xf32, #tpu.memory_space<vmem>>, vector<1x64xf32>
    %11 = vector.broadcast %10 : vector<1x64xf32> to vector<128x64xf32>
    %12 = arith.addf %9, %11 : vector<128x64xf32>
    %cst_9 = arith.constant 0.000000e+00 : f32
    %13 = vector.broadcast %cst_9 : f32 to vector<128x64xf32>
    %14 = arith.maximumf %12, %13 : vector<128x64xf32>
    %c0_10 = arith.constant 0 : index
    %c0_11 = arith.constant 0 : index
    %15 = vector.load %arg6[%c0_10, %c0_11] : memref<64x32xf32, #tpu.memory_space<vmem>>, vector<64x32xf32>
    %cst_12 = arith.constant dense<0.000000e+00> : vector<128x32xf32>
    %16 = tpu.matmul %14, %15, %cst_12 {dimension_numbers = #tpu.dot_dimension_numbers<[1], [0], [0], [1], [0, 0, 1, 1], [], []>} : vector<128x64xf32>, vector<64x32xf32>, vector<128x32xf32> -> vector<128x32xf32>
    %c0_13 = arith.constant 0 : index
    %c0_14 = arith.constant 0 : index
    %17 = vector.load %arg7[%c0_13, %c0_14] : memref<1x32xf32, #tpu.memory_space<vmem>>, vector<1x32xf32>
    %18 = vector.broadcast %17 : vector<1x32xf32> to vector<128x32xf32>
    %19 = arith.addf %16, %18 : vector<128x32xf32>
    %cst_15 = arith.constant 0.000000e+00 : f32
    %20 = vector.broadcast %cst_15 : f32 to vector<128x32xf32>
    %21 = arith.maximumf %19, %20 : vector<128x32xf32>
    %c0_16 = arith.constant 0 : index
    %c0_17 = arith.constant 0 : index
    %22 = vector.load %arg8[%c0_16, %c0_17] : memref<1x32xf32, #tpu.memory_space<vmem>>, vector<1x32xf32>
    %cst_18 = arith.constant dense<0.000000e+00> : vector<1x128xf32>
    %23 = tpu.matmul %22, %21, %cst_18 {dimension_numbers = #tpu.dot_dimension_numbers<[1], [1], [0], [0], [0, 0, 1, 0], [], []>} : vector<1x32xf32>, vector<128x32xf32>, vector<1x128xf32> -> vector<1x128xf32>
    %c0_19 = arith.constant 0 : index
    %c0_20 = arith.constant 0 : index
    %24 = vector.load %arg9[%c0_19, %c0_20] : memref<1x1xf32, #tpu.memory_space<vmem>>, vector<1x1xf32>
    %25 = vector.broadcast %24 : vector<1x1xf32> to vector<1x128xf32>
    %26 = arith.addf %23, %25 : vector<1x128xf32>
    %c0_21 = arith.constant 0 : index
    %c0_22 = arith.constant 0 : index
    %27 = vector.load %arg10[%c0_21, %c0_22] : memref<1x128xf32, #tpu.memory_space<vmem>>, vector<1x128xf32>
    tpu.vector_store %arg10[%c0_21, %c0_22], %26 {strides = array<i32>} : memref<1x128xf32, #tpu.memory_space<vmem>>, vector<1x128xf32>,
    return
  }
  func.func @transform_0(%arg0: i32) -> (i32, i32) {
    %c0_i32 = arith.constant 0 : i32
    %c0_i32_0 = arith.constant 0 : i32
    return %arg0, %c0_i32 : i32, i32
  }
  func.func @transform_1(%arg0: i32) -> (i32, i32) {
    %c0_i32 = arith.constant 0 : i32
    %c0_i32_0 = arith.constant 0 : i32
    return %c0_i32, %arg0 : i32, i32
  }
  func.func @transform_2(%arg0: i32) -> (i32, i32) {
    %c0_i32 = arith.constant 0 : i32
    %c0_i32_0 = arith.constant 0 : i32
    %c0_i32_1 = arith.constant 0 : i32
    return %c0_i32, %c0_i32_0 : i32, i32
  }
  func.func @transform_3(%arg0: i32) -> (i32, i32) {
    %c0_i32 = arith.constant 0 : i32
    %c0_i32_0 = arith.constant 0 : i32
    %c0_i32_1 = arith.constant 0 : i32
    return %c0_i32, %c0_i32_0 : i32, i32
  }
  func.func @transform_4(%arg0: i32) -> (i32, i32) {
    %c0_i32 = arith.constant 0 : i32
    %c0_i32_0 = arith.constant 0 : i32
    %c0_i32_1 = arith.constant 0 : i32
    return %c0_i32, %c0_i32_0 : i32, i32
  }
  func.func @transform_5(%arg0: i32) -> (i32, i32) {
    %c0_i32 = arith.constant 0 : i32
    %c0_i32_0 = arith.constant 0 : i32
    %c0_i32_1 = arith.constant 0 : i32
    return %c0_i32, %c0_i32_0 : i32, i32
  }
  func.func @transform_6(%arg0: i32) -> (i32, i32) {
    %c0_i32 = arith.constant 0 : i32
    %c0_i32_0 = arith.constant 0 : i32
    %c0_i32_1 = arith.constant 0 : i32
    return %c0_i32, %c0_i32_0 : i32, i32
  }
  func.func @transform_7(%arg0: i32) -> (i32, i32) {
    %c0_i32 = arith.constant 0 : i32
    %c0_i32_0 = arith.constant 0 : i32
    %c0_i32_1 = arith.constant 0 : i32
    return %c0_i32, %c0_i32_0 : i32, i32
  }
  func.func @transform_8(%arg0: i32) -> (i32, i32) {
    %c0_i32 = arith.constant 0 : i32
    %c0_i32_0 = arith.constant 0 : i32
    %c0_i32_1 = arith.constant 0 : i32
    return %c0_i32, %c0_i32_0 : i32, i32
  }
  func.func @transform_9(%arg0: i32) -> (i32, i32) {
    %c0_i32 = arith.constant 0 : i32
    %c0_i32_0 = arith.constant 0 : i32
    return %c0_i32, %arg0 : i32, i32
  }
}

</mosaic_0001>

<llo_original>
// kernel: tpu_custom_call.1
$region0: #{tpu_custom_call.1}
  #allocation0 [shape = 'u32[]', space=smem, size = 0x4, offset = 0x4, fixed_abs, tag = 'smem constant byte address 0x4 - core index']
  #allocation1 [shape = 'u32[144,128]{1,0:T(1,128)}', space=vmem, size = 0x12000, scoped, tag = 'internal scratch']
  #allocation2 [shape = 'f32[1,1]{1,0:T(1,128)S(1)}', space=vmem, size = 0x200, scoped, tag = 'scoped memory for tpu_custom_call.1']
  %s0 = inlined_call_operand.vmem [shape: f32[8,16], index: 0, kind: input, shape index: {}]
  %s1 = inlined_call_operand.vmem [shape: f32[1,8], index: 1, kind: input, shape index: {}]
  %s2 = inlined_call_operand.vmem [shape: f32[16,64], index: 2, kind: input, shape index: {}]
  %s3 = inlined_call_operand.vmem [shape: f32[1,64], index: 3, kind: input, shape index: {}]
  %s4 = inlined_call_operand.vmem [shape: f32[1,64], index: 4, kind: input, shape index: {}]
  %s5 = inlined_call_operand.vmem [shape: f32[64,32], index: 5, kind: input, shape index: {}]
  %s6 = inlined_call_operand.vmem [shape: f32[1,32], index: 6, kind: input, shape index: {}]
  %s7 = inlined_call_operand.vmem [shape: f32[1,32], index: 7, kind: input, shape index: {}]
  %s8 = inlined_call_operand.<no memory space> [shape: f32[1,1], index: 8, kind: input, shape index: {}]
  %s9 = inlined_call_operand.hbm [shape: f32[1,8], index: 9, kind: output, shape index: {}]
  %s10 = sld [smem:[#allocation0]]
  $region46: #{tpu_custom_call.1} parent=0
    _
  %s12 = ssub.s32 1, %s10
  %s13 = scalar_select 0, %s12, %s10
  %v14 = vstv %s8
  %15 = vst [vmem:[#allocation2] sm:$0x1] %v14
  $region1: #{tpu_custom_call.1} parent=0
    #allocation3 [shape = 'u8[512]{0}', space=vmem, size = 0x400, scoped, tag = 'output window, operand 0, single buffered']
    #allocation4 [shape = 's32[1]{0}', space=sflag, size = 0x4, scoped, tag = 'scoped memory for tpu_custom_call.1']
    %16 = vsyncpa [#allocation4], 0
    // Predicated region
    $region2: #{tpu_custom_call.1} parent=1 // pred_check
      _
    $region3: #{tpu_custom_call.1} parent=1 // pred_check_branch
      %18 = sbr.rel (0) target = $region5
    $region4: #{tpu_custom_call.1} parent=1 // pred_region
      _
    $region5: #{tpu_custom_call.1} parent=1 // pred_fallthru
      _
    // Predicated region
    $region6: #{tpu_custom_call.1} parent=1 // pred_check
      _
    $region7: #{tpu_custom_call.1} parent=1 // pred_check_branch
      %20 = sbr.rel (0) target = $region9
    $region8: #{tpu_custom_call.1} parent=1 // pred_region
      _
    $region9: #{tpu_custom_call.1} parent=1 // pred_fallthru
      _
    // Predicated region
    $region10: #{tpu_custom_call.1} parent=1 // pred_check
      _
    $region11: #{tpu_custom_call.1} parent=1 // pred_check_branch
      %22 = sbr.rel (0) target = $region13
    $region12: #{tpu_custom_call.1} parent=1 // pred_region
      _
    $region13: #{tpu_custom_call.1} parent=1 // pred_fallthru
      _
    // Predicated region
    $region14: #{tpu_custom_call.1} parent=1 // pred_check
      _
    $region15: #{tpu_custom_call.1} parent=1 // pred_check_branch
      %24 = sbr.rel (0) target = $region17
    $region16: #{tpu_custom_call.1} parent=1 // pred_region
      _
    $region17: #{tpu_custom_call.1} parent=1 // pred_fallthru
      _
    // Predicated region
    $region18: #{tpu_custom_call.1} parent=1 // pred_check
      _
    $region19: #{tpu_custom_call.1} parent=1 // pred_check_branch
      %26 = sbr.rel (0) target = $region21
    $region20: #{tpu_custom_call.1} parent=1 // pred_region
      _
    $region21: #{tpu_custom_call.1} parent=1 // pred_fallthru
      _
    // Predicated region
    $region22: #{tpu_custom_call.1} parent=1 // pred_check
      _
    $region23: #{tpu_custom_call.1} parent=1 // pred_check_branch
      %28 = sbr.rel (0) target = $region25
    $region24: #{tpu_custom_call.1} parent=1 // pred_region
      _
    $region25: #{tpu_custom_call.1} parent=1 // pred_fallthru
      _
    // Predicated region
    $region26: #{tpu_custom_call.1} parent=1 // pred_check
      _
    $region27: #{tpu_custom_call.1} parent=1 // pred_check_branch
      %30 = sbr.rel (0) target = $region29
    $region28: #{tpu_custom_call.1} parent=1 // pred_region
      _
    $region29: #{tpu_custom_call.1} parent=1 // pred_fallthru
      _
    // Predicated region
    $region30: #{tpu_custom_call.1} parent=1 // pred_check
      _
    $region31: #{tpu_custom_call.1} parent=1 // pred_check_branch
      %32 = sbr.rel (0) target = $region33
    $region32: #{tpu_custom_call.1} parent=1 // pred_region
      _
    $region33: #{tpu_custom_call.1} parent=1 // pred_fallthru
      _
    // Predicated region
    $region34: #{tpu_custom_call.1} parent=1 // pred_check
      _
    $region35: #{tpu_custom_call.1} parent=1 // pred_check_branch
      %34 = sbr.rel (0) target = $region37
    $region36: #{tpu_custom_call.1} parent=1 // pred_region
      _
    $region37: #{tpu_custom_call.1} parent=1 // pred_fallthru
      _
    %v35 = vld [vmem:[%s0] sm:$0xff]
    %v36 = vld [vmem:[%s0 + $0x8] sm:$0xff]
    %v37 = vld [vmem:[%s0 + $0x10] sm:$0xff]
    %v38 = vld [vmem:[%s0 + $0x18] sm:$0xff]
    %v39 = vld [vmem:[%s0 + $0x20] sm:$0xff]
    %v40 = vld [vmem:[%s0 + $0x28] sm:$0xff]
    %v41 = vld [vmem:[%s0 + $0x30] sm:$0xff]
    %v42 = vld [vmem:[%s0 + $0x38] sm:$0xff]
    %v43 = vld [vmem:[%s0 + $0x40] sm:$0xff]
    %v44 = vld [vmem:[%s0 + $0x48] sm:$0xff]
    %v45 = vld [vmem:[%s0 + $0x50] sm:$0xff]
    %v46 = vld [vmem:[%s0 + $0x58] sm:$0xff]
    %v47 = vld [vmem:[%s0 + $0x60] sm:$0xff]
    %v48 = vld [vmem:[%s0 + $0x68] sm:$0xff]
    %v49 = vld [vmem:[%s0 + $0x70] sm:$0xff]
    %v50 = vld [vmem:[%s0 + $0x78] sm:$0xff]
    %v51 = vld [vmem:[%s2] sm:$0xff]
    %v52 = vld [vmem:[%s2 + $0x8] sm:$0xff]
    %v53 = vld [vmem:[%s1] sm:$0x1]
    %54 = vxpose.xlu0.b32.start [1/16] %v53, 128
    %55 = vxpose.xlu0.b32.cont [2/16] 0.0, 128
    %56 = vxpose.xlu0.b32.cont [3/16] 0.0, 128
    %57 = vxpose.xlu0.b32.cont [4/16] 0.0, 128
    %58 = vxpose.xlu0.b32.cont [5/16] 0.0, 128
    %59 = vxpose.xlu0.b32.cont [6/16] 0.0, 128
    %60 = vxpose.xlu0.b32.cont [7/16] 0.0, 128
    %61 = vxpose.xlu0.b32.cont [8/16] 0.0, 128
    %62 = vxpose.xlu0.b32.cont [9/16] 0.0, 128
    %63 = vxpose.xlu0.b32.cont [10/16] 0.0, 128
    %64 = vxpose.xlu0.b32.cont [11/16] 0.0, 128
    %65 = vxpose.xlu0.b32.cont [12/16] 0.0, 128
    %66 = vxpose.xlu0.b32.cont [13/16] 0.0, 128
    %67 = vxpose.xlu0.b32.cont [14/16] 0.0, 128
    %68 = vxpose.xlu0.b32.cont [15/16] 0.0, 128
    %69 = vxpose.xlu0.b32.end [16/16] 0.0, 128
    %v70 = vpop.trf.xlu0
    %v71 = vpop.trf.xlu0
    %v72 = vpop.trf.xlu0
    %v73 = vpop.trf.xlu0
    %v74 = vpop.trf.xlu0
    %v75 = vpop.trf.xlu0
    %v76 = vpop.trf.xlu0
    %v77 = vpop.trf.xlu0
    %v78 = vpop.trf.xlu0
    %v79 = vpop.trf.xlu0
    %v80 = vpop.trf.xlu0
    %v81 = vpop.trf.xlu0
    %v82 = vpop.trf.xlu0
    %v83 = vpop.trf.xlu0
    %v84 = vpop.trf.xlu0
    %v85 = vpop.trf.xlu0
    %v86 = vld [vmem:[%s3] sm:$0x1]
    %88 = vset.pattern.permute.xlu0 0
    %89 = vperm.xlu0 %88, %v70
    %v90 = vpop.permute.xlu0 %89
    %93 = vset.pattern.permute.xlu0 0
    %94 = vperm.xlu0 %93, %v71
    %v95 = vpop.permute.xlu0 %94
    %98 = vset.pattern.permute.xlu0 0
    %99 = vperm.xlu0 %98, %v72
    %v100 = vpop.permute.xlu0 %99
    %103 = vset.pattern.permute.xlu0 0
    %104 = vperm.xlu0 %103, %v73
    %v105 = vpop.permute.xlu0 %104
    %108 = vset.pattern.permute.xlu0 0
    %109 = vperm.xlu0 %108, %v74
    %v110 = vpop.permute.xlu0 %109
    %113 = vset.pattern.permute.xlu0 0
    %114 = vperm.xlu0 %113, %v75
    %v115 = vpop.permute.xlu0 %114
    %118 = vset.pattern.permute.xlu0 0
    %119 = vperm.xlu0 %118, %v76
    %v120 = vpop.permute.xlu0 %119
    %123 = vset.pattern.permute.xlu0 0
    %124 = vperm.xlu0 %123, %v77
    %v125 = vpop.permute.xlu0 %124
    %128 = vset.pattern.permute.xlu0 0
    %129 = vperm.xlu0 %128, %v78
    %v130 = vpop.permute.xlu0 %129
    %133 = vset.pattern.permute.xlu0 0
    %134 = vperm.xlu0 %133, %v79
    %v135 = vpop.permute.xlu0 %134
    %138 = vset.pattern.permute.xlu0 0
    %139 = vperm.xlu0 %138, %v80
    %v140 = vpop.permute.xlu0 %139
    %143 = vset.pattern.permute.xlu0 0
    %144 = vperm.xlu0 %143, %v81
    %v145 = vpop.permute.xlu0 %144
    %148 = vset.pattern.permute.xlu0 0
    %149 = vperm.xlu0 %148, %v82
    %v150 = vpop.permute.xlu0 %149
    %153 = vset.pattern.permute.xlu0 0
    %154 = vperm.xlu0 %153, %v83
    %v155 = vpop.permute.xlu0 %154
    %158 = vset.pattern.permute.xlu0 0
    %159 = vperm.xlu0 %158, %v84
    %v160 = vpop.permute.xlu0 %159
    %163 = vset.pattern.permute.xlu0 0
    %164 = vperm.xlu0 %163, %v85
    %v165 = vpop.permute.xlu0 %164
    %v168 = vlaneseq
    %v169 = vshrl.u32 %v168, 7
    %v170 = vsub.s32 0, %v169
    %v171 = vrot.slane %v86, %v170
    %v173 = vmul.f32 %v90, %v171
    %v174 = vmul.f32 %v95, %v171
    %v175 = vmul.f32 %v100, %v171
    %v176 = vmul.f32 %v105, %v171
    %v177 = vmul.f32 %v110, %v171
    %v178 = vmul.f32 %v115, %v171
    %v179 = vmul.f32 %v120, %v171
    %v180 = vmul.f32 %v125, %v171
    %v181 = vmul.f32 %v130, %v171
    %v182 = vmul.f32 %v135, %v171
    %v183 = vmul.f32 %v140, %v171
    %v184 = vmul.f32 %v145, %v171
    %v185 = vmul.f32 %v150, %v171
    %v186 = vmul.f32 %v155, %v171
    %v187 = vmul.f32 %v160, %v171
    %v188 = vmul.f32 %v165, %v171
    %vm189 = vcmask 130048
    %v191 = vsel %vm189, %v35, 0
    %v194 = vsel %vm189, %v36, 0
    %v197 = vsel %vm189, %v37, 0
    %v200 = vsel %vm189, %v38, 0
    %v203 = vsel %vm189, %v39, 0
    %v206 = vsel %vm189, %v40, 0
    %v209 = vsel %vm189, %v41, 0
    %v212 = vsel %vm189, %v42, 0
    %v215 = vsel %vm189, %v43, 0
    %v218 = vsel %vm189, %v44, 0
    %v221 = vsel %vm189, %v45, 0
    %v224 = vsel %vm189, %v46, 0
    %v227 = vsel %vm189, %v47, 0
    %v230 = vsel %vm189, %v48, 0
    %v233 = vsel %vm189, %v49, 0
    %v236 = vsel %vm189, %v50, 0
    %238 = vmatprep.subr.mxu0 0.0
    %239 = vmatpush1.msra.mxu0 %v51
    %240 = vmatprep.subr.mxu0 0.0
    %241 = vmatpush1.msra.mxu0 %v52
    %242 = vmatprep.subr.mxu0 0.0
    %243 = vmatpush1.msra.mxu0 0.0
    %244 = vmatprep.subr.mxu0 0.0
    %245 = vmatpush1.msra.mxu0 0.0
    %246 = vmatprep.subr.mxu0 0.0
    %247 = vmatpush1.msra.mxu0 0.0
    %248 = vmatprep.subr.mxu0 0.0
    %249 = vmatpush1.msra.mxu0 0.0
    %250 = vmatprep.subr.mxu0 0.0
    %251 = vmatpush1.msra.mxu0 0.0
    %252 = vmatprep.subr.mxu0 0.0
    %253 = vmatpush1.msra.mxu0 0.0
    %254 = vmatprep.subr.mxu0 0.0
    %255 = vmatpush1.msra.mxu0 0.0
    %256 = vmatprep.subr.mxu0 0.0
    %257 = vmatpush1.msra.mxu0 0.0
    %258 = vmatprep.subr.mxu0 0.0
    %259 = vmatpush1.msra.mxu0 0.0
    %260 = vmatprep.subr.mxu0 0.0
    %261 = vmatpush1.msra.mxu0 0.0
    %262 = vmatprep.subr.mxu0 0.0
    %263 = vmatpush1.msra.mxu0 0.0
    %264 = vmatprep.subr.mxu0 0.0
    %265 = vmatpush1.msra.mxu0 0.0
    %266 = vmatprep.subr.mxu0 0.0
    %267 = vmatpush1.msra.mxu0 0.0
    %268 = vmatprep.subr.mxu0 0.0
    %269 = vmatpush1.msra.mxu0 0.0
    %270 = vmatprep.subr.mxu0 0.0
    %271 = vmatpush1.msra.mxu0 0.0
    %272 = vmatprep.subr.mxu0 0.0
    %273 = vmatpush1.msra.mxu0 0.0
    %274 = vmatprep.subr.mxu0 0.0
    %275 = vmatpush1.msra.mxu0 0.0
    %276 = vmatprep.subr.mxu0 0.0
    %277 = vmatpush1.msra.mxu0 0.0
    %278 = vmatprep.subr.mxu0 0.0
    %279 = vmatpush1.msra.mxu0 0.0
    %280 = vmatprep.subr.mxu0 0.0
    %281 = vmatpush1.msra.mxu0 0.0
    %282 = vmatprep.subr.mxu0 0.0
    %283 = vmatpush1.msra.mxu0 0.0
    %284 = vmatprep.subr.mxu0 0.0
    %285 = vmatpush1.msra.mxu0 0.0
    %286 = vmatprep.subr.mxu0 0.0
    %287 = vmatpush1.msra.mxu0 0.0
    %288 = vmatprep.subr.mxu0 0.0
    %289 = vmatpush1.msra.mxu0 0.0
    %290 = vmatprep.subr.mxu0 0.0
    %291 = vmatpush1.msra.mxu0 0.0
    %292 = vmatprep.subr.mxu0 0.0
    %293 = vmatpush1.msra.mxu0 0.0
    %294 = vmatprep.subr.mxu0 0.0
    %295 = vmatpush1.msra.mxu0 0.0
    %296 = vmatprep.subr.mxu0 0.0
    %297 = vmatpush1.msra.mxu0 0.0
    %298 = vmatprep.subr.mxu0 0.0
    %299 = vmatpush1.msra.mxu0 0.0
    %300 = vmatprep.subr.mxu0 0.0
    %301 = vmatpush1.msra.mxu0 0.0
    %302 = vmatprep.mubr.f32.mxu0 0.0
    %303 = vmatmul.mubr.f32.gmra.mrb[0].mxu0 %v191
    %v304 = vpop.f32.mrb[0].mxu0
    %v305 = vadd.f32 %v173, %v304
    %v306 = vpop.f32.mrb[0].mxu0
    %307 = vmatprep.mubr.f32.mxu0 0.0
    %308 = vmatmul.mubr.f32.gmra.mrb[0].mxu0 %v194
    %v309 = vpop.f32.mrb[0].mxu0
    %v310 = vadd.f32 %v174, %v309
    %v311 = vpop.f32.mrb[0].mxu0
    %312 = vmatprep.mubr.f32.mxu0 0.0
    %313 = vmatmul.mubr.f32.gmra.mrb[0].mxu0 %v197
    %v314 = vpop.f32.mrb[0].mxu0
    %v315 = vadd.f32 %v175, %v314
    %v316 = vpop.f32.mrb[0].mxu0
    %317 = vmatprep.mubr.f32.mxu0 0.0
    %318 = vmatmul.mubr.f32.gmra.mrb[0].mxu0 %v200
    %v319 = vpop.f32.mrb[0].mxu0
    %v320 = vadd.f32 %v176, %v319
    %v321 = vpop.f32.mrb[0].mxu0
    %322 = vmatprep.mubr.f32.mxu0 0.0
    %323 = vmatmul.mubr.f32.gmra.mrb[0].mxu0 %v203
    %v324 = vpop.f32.mrb[0].mxu0
    %v325 = vadd.f32 %v177, %v324
    %v326 = vpop.f32.mrb[0].mxu0
    %327 = vmatprep.mubr.f32.mxu0 0.0
    %328 = vmatmul.mubr.f32.gmra.mrb[0].mxu0 %v206
    %v329 = vpop.f32.mrb[0].mxu0
    %v330 = vadd.f32 %v178, %v329
    %v331 = vpop.f32.mrb[0].mxu0
    %332 = vmatprep.mubr.f32.mxu0 0.0
    %333 = vmatmul.mubr.f32.gmra.mrb[0].mxu0 %v209
    %v334 = vpop.f32.mrb[0].mxu0
    %v335 = vadd.f32 %v179, %v334
    %v336 = vpop.f32.mrb[0].mxu0
    %337 = vmatprep.mubr.f32.mxu0 0.0
    %338 = vmatmul.mubr.f32.gmra.mrb[0].mxu0 %v212
    %v339 = vpop.f32.mrb[0].mxu0
    %v340 = vadd.f32 %v180, %v339
    %v341 = vpop.f32.mrb[0].mxu0
    %342 = vmatprep.mubr.f32.mxu0 0.0
    %343 = vmatmul.mubr.f32.gmra.mrb[0].mxu0 %v215
    %v344 = vpop.f32.mrb[0].mxu0
    %v345 = vadd.f32 %v181, %v344
    %v346 = vpop.f32.mrb[0].mxu0
    %347 = vmatprep.mubr.f32.mxu0 0.0
    %348 = vmatmul.mubr.f32.gmra.mrb[0].mxu0 %v218
    %v349 = vpop.f32.mrb[0].mxu0
    %v350 = vadd.f32 %v182, %v349
    %v351 = vpop.f32.mrb[0].mxu0
    %352 = vmatprep.mubr.f32.mxu0 0.0
    %353 = vmatmul.mubr.f32.gmra.mrb[0].mxu0 %v221
    %v354 = vpop.f32.mrb[0].mxu0
    %v355 = vadd.f32 %v183, %v354
    %v356 = vpop.f32.mrb[0].mxu0
    %357 = vmatprep.mubr.f32.mxu0 0.0
    %358 = vmatmul.mubr.f32.gmra.mrb[0].mxu0 %v224
    %v359 = vpop.f32.mrb[0].mxu0
    %v360 = vadd.f32 %v184, %v359
    %v361 = vpop.f32.mrb[0].mxu0
    %362 = vmatprep.mubr.f32.mxu0 0.0
    %363 = vmatmul.mubr.f32.gmra.mrb[0].mxu0 %v227
    %v364 = vpop.f32.mrb[0].mxu0
    %v365 = vadd.f32 %v185, %v364
    %v366 = vpop.f32.mrb[0].mxu0
    %367 = vmatprep.mubr.f32.mxu0 0.0
    %368 = vmatmul.mubr.f32.gmra.mrb[0].mxu0 %v230
    %v369 = vpop.f32.mrb[0].mxu0
    %v370 = vadd.f32 %v186, %v369
    %v371 = vpop.f32.mrb[0].mxu0
    %372 = vmatprep.mubr.f32.mxu0 0.0
    %373 = vmatmul.mubr.f32.gmra.mrb[0].mxu0 %v233
    %v374 = vpop.f32.mrb[0].mxu0
    %v375 = vadd.f32 %v187, %v374
    %v376 = vpop.f32.mrb[0].mxu0
    %377 = vmatprep.mubr.f32.mxu0 0.0
    %378 = vmatmul.mubr.f32.gmra.mrb[0].mxu0 %v236
    %v379 = vpop.f32.mrb[0].mxu0
    %v380 = vadd.f32 %v188, %v379
    %v381 = vpop.f32.mrb[0].mxu0
    %382 = vdwg.mxu0
    %v383 = vld [vmem:[%s4] sm:$0x1]
    %v385 = vlaneseq
    %v386 = vshrl.u32 %v385, 7
    %v387 = vsub.s32 0, %v386
    %v388 = vrot.slane %v383, %v387
    %v390 = vadd.f32 %v305, %v388
    %v391 = vadd.f32 %v310, %v388
    %v392 = vadd.f32 %v315, %v388
    %v393 = vadd.f32 %v320, %v388
    %v394 = vadd.f32 %v325, %v388
    %v395 = vadd.f32 %v330, %v388
    %v396 = vadd.f32 %v335, %v388
    %v397 = vadd.f32 %v340, %v388
    %v398 = vadd.f32 %v345, %v388
    %v399 = vadd.f32 %v350, %v388
    %v400 = vadd.f32 %v355, %v388
    %v401 = vadd.f32 %v360, %v388
    %v402 = vadd.f32 %v365, %v388
    %v403 = vadd.f32 %v370, %v388
    %v404 = vadd.f32 %v375, %v388
    %v405 = vadd.f32 %v380, %v388
    %v406 = vmax.f32 %v390, 0.0
    %v407 = vmax.f32 %v391, 0.0
    %v408 = vmax.f32 %v392, 0.0
    %v409 = vmax.f32 %v393, 0.0
    %v410 = vmax.f32 %v394, 0.0
    %v411 = vmax.f32 %v395, 0.0
    %v412 = vmax.f32 %v396, 0.0
    %v413 = vmax.f32 %v397, 0.0
    %v414 = vmax.f32 %v398, 0.0
    %v415 = vmax.f32 %v399, 0.0
    %v416 = vmax.f32 %v400, 0.0
    %v417 = vmax.f32 %v401, 0.0
    %v418 = vmax.f32 %v402, 0.0
    %v419 = vmax.f32 %v403, 0.0
    %v420 = vmax.f32 %v404, 0.0
    %v421 = vmax.f32 %v405, 0.0
    %v422 = vld [vmem:[%s5] sm:$0xff]
    %v423 = vld [vmem:[%s5 + $0x8] sm:$0xff]
    %v424 = vld [vmem:[%s5 + $0x10] sm:$0xff]
    %v425 = vld [vmem:[%s5 + $0x18] sm:$0xff]
    %v426 = vld [vmem:[%s5 + $0x20] sm:$0xff]
    %v427 = vld [vmem:[%s5 + $0x28] sm:$0xff]
    %v428 = vld [vmem:[%s5 + $0x30] sm:$0xff]
    %v429 = vld [vmem:[%s5 + $0x38] sm:$0xff]
    %v430 = vld [vmem:[%s6] sm:$0x1]
    %v432 = vlaneseq
    %v433 = vshrl.u32 %v432, 7
    %v434 = vsub.s32 0, %v433
    %v435 = vrot.slane %v430, %v434
    %vm437 = vcmask 523264
    %v439 = vsel %vm437, %v406, 0
    %v442 = vsel %vm437, %v407, 0
    %v445 = vsel %vm437, %v408, 0
    %v448 = vsel %vm437, %v409, 0
    %v451 = vsel %vm437, %v410, 0
    %v454 = vsel %vm437, %v411, 0
    %v457 = vsel %vm437, %v412, 0
    %v460 = vsel %vm437, %v413, 0
    %v463 = vsel %vm437, %v414, 0
    %v466 = vsel %vm437, %v415, 0
    %v469 = vsel %vm437, %v416, 0
    %v472 = vsel %vm437, %v417, 0
    %v475 = vsel %vm437, %v418, 0
    %v478 = vsel %vm437, %v419, 0
    %v481 = vsel %vm437, %v420, 0
    %v484 = vsel %vm437, %v421, 0
    %486 = vmatprep.subr.mxu0 0.0
    %487 = vmatpush1.msra.mxu0 %v422
    %488 = vmatprep.subr.mxu0 0.0
    %489 = vmatpush1.msra.mxu0 %v423
    %490 = vmatprep.subr.mxu0 0.0
    %491 = vmatpush1.msra.mxu0 %v424
    %492 = vmatprep.subr.mxu0 0.0
    %493 = vmatpush1.msra.mxu0 %v425
    %494 = vmatprep.subr.mxu0 0.0
    %495 = vmatpush1.msra.mxu0 %v426
    %496 = vmatprep.subr.mxu0 0.0
    %497 = vmatpush1.msra.mxu0 %v427
    %498 = vmatprep.subr.mxu0 0.0
    %499 = vmatpush1.msra.mxu0 %v428
    %500 = vmatprep.subr.mxu0 0.0
    %501 = vmatpush1.msra.mxu0 %v429
    %502 = vmatprep.subr.mxu0 0.0
    %503 = vmatpush1.msra.mxu0 0.0
    %504 = vmatprep.subr.mxu0 0.0
    %505 = vmatpush1.msra.mxu0 0.0
    %506 = vmatprep.subr.mxu0 0.0
    %507 = vmatpush1.msra.mxu0 0.0
    %508 = vmatprep.subr.mxu0 0.0
    %509 = vmatpush1.msra.mxu0 0.0
    %510 = vmatprep.subr.mxu0 0.0
    %511 = vmatpush1.msra.mxu0 0.0
    %512 = vmatprep.subr.mxu0 0.0
    %513 = vmatpush1.msra.mxu0 0.0
    %514 = vmatprep.subr.mxu0 0.0
    %515 = vmatpush1.msra.mxu0 0.0
    %516 = vmatprep.subr.mxu0 0.0
    %517 = vmatpush1.msra.mxu0 0.0
    %518 = vmatprep.subr.mxu0 0.0
    %519 = vmatpush1.msra.mxu0 0.0
    %520 = vmatprep.subr.mxu0 0.0
    %521 = vmatpush1.msra.mxu0 0.0
    %522 = vmatprep.subr.mxu0 0.0
    %523 = vmatpush1.msra.mxu0 0.0
    %524 = vmatprep.subr.mxu0 0.0
    %525 = vmatpush1.msra.mxu0 0.0
    %526 = vmatprep.subr.mxu0 0.0
    %527 = vmatpush1.msra.mxu0 0.0
    %528 = vmatprep.subr.mxu0 0.0
    %529 = vmatpush1.msra.mxu0 0.0
    %530 = vmatprep.subr.mxu0 0.0
    %531 = vmatpush1.msra.mxu0 0.0
    %532 = vmatprep.subr.mxu0 0.0
    %533 = vmatpush1.msra.mxu0 0.0
    %534 = vmatprep.subr.mxu0 0.0
    %535 = vmatpush1.msra.mxu0 0.0
    %536 = vmatprep.subr.mxu0 0.0
    %537 = vmatpush1.msra.mxu0 0.0
    %538 = vmatprep.subr.mxu0 0.0
    %539 = vmatpush1.msra.mxu0 0.0
    %540 = vmatprep.subr.mxu0 0.0
    %541 = vmatpush1.msra.mxu0 0.0
    %542 = vmatprep.subr.mxu0 0.0
    %543 = vmatpush1.msra.mxu0 0.0
    %544 = vmatprep.subr.mxu0 0.0
    %545 = vmatpush1.msra.mxu0 0.0
    %546 = vmatprep.subr.mxu0 0.0
    %547 = vmatpush1.msra.mxu0 0.0
    %548 = vmatprep.subr.mxu0 0.0
    %549 = vmatpush1.msra.mxu0 0.0
    %550 = vmatprep.mubr.f32.mxu0 0.0
    %551 = vmatmul.mubr.f32.gmra.mrb[0].mxu0 %v439
    %v552 = vpop.f32.mrb[0].mxu0
    %v553 = vadd.f32 %v435, %v552
    %v554 = vpop.f32.mrb[0].mxu0
    %555 = vmatprep.mubr.f32.mxu0 0.0
    %556 = vmatmul.mubr.f32.gmra.mrb[0].mxu0 %v442
    %v557 = vpop.f32.mrb[0].mxu0
    %v558 = vadd.f32 %v435, %v557
    %v559 = vpop.f32.mrb[0].mxu0
    %560 = vmatprep.mubr.f32.mxu0 0.0
    %561 = vmatmul.mubr.f32.gmra.mrb[0].mxu0 %v445
    %v562 = vpop.f32.mrb[0].mxu0
    %v563 = vadd.f32 %v435, %v562
    %v564 = vpop.f32.mrb[0].mxu0
    %565 = vmatprep.mubr.f32.mxu0 0.0
    %566 = vmatmul.mubr.f32.gmra.mrb[0].mxu0 %v448
    %v567 = vpop.f32.mrb[0].mxu0
    %v568 = vadd.f32 %v435, %v567
    %v569 = vpop.f32.mrb[0].mxu0
    %570 = vmatprep.mubr.f32.mxu0 0.0
    %571 = vmatmul.mubr.f32.gmra.mrb[0].mxu0 %v451
    %v572 = vpop.f32.mrb[0].mxu0
    %v573 = vadd.f32 %v435, %v572
    %v574 = vpop.f32.mrb[0].mxu0
    %575 = vmatprep.mubr.f32.mxu0 0.0
    %576 = vmatmul.mubr.f32.gmra.mrb[0].mxu0 %v454
    %v577 = vpop.f32.mrb[0].mxu0
    %v578 = vadd.f32 %v435, %v577
    %v579 = vpop.f32.mrb[0].mxu0
    %580 = vmatprep.mubr.f32.mxu0 0.0
    %581 = vmatmul.mubr.f32.gmra.mrb[0].mxu0 %v457
    %v582 = vpop.f32.mrb[0].mxu0
    %v583 = vadd.f32 %v435, %v582
    %v584 = vpop.f32.mrb[0].mxu0
    %585 = vmatprep.mubr.f32.mxu0 0.0
    %586 = vmatmul.mubr.f32.gmra.mrb[0].mxu0 %v460
    %v587 = vpop.f32.mrb[0].mxu0
    %v588 = vadd.f32 %v435, %v587
    %v589 = vpop.f32.mrb[0].mxu0
    %590 = vmatprep.mubr.f32.mxu0 0.0
    %591 = vmatmul.mubr.f32.gmra.mrb[0].mxu0 %v463
    %v592 = vpop.f32.mrb[0].mxu0
    %v593 = vadd.f32 %v435, %v592
    %v594 = vpop.f32.mrb[0].mxu0
    %595 = vmatprep.mubr.f32.mxu0 0.0
    %596 = vmatmul.mubr.f32.gmra.mrb[0].mxu0 %v466
    %v597 = vpop.f32.mrb[0].mxu0
    %v598 = vadd.f32 %v435, %v597
    %v599 = vpop.f32.mrb[0].mxu0
    %600 = vmatprep.mubr.f32.mxu0 0.0
    %601 = vmatmul.mubr.f32.gmra.mrb[0].mxu0 %v469
    %v602 = vpop.f32.mrb[0].mxu0
    %v603 = vadd.f32 %v435, %v602
    %v604 = vpop.f32.mrb[0].mxu0
    %605 = vmatprep.mubr.f32.mxu0 0.0
    %606 = vmatmul.mubr.f32.gmra.mrb[0].mxu0 %v472
    %v607 = vpop.f32.mrb[0].mxu0
    %v608 = vadd.f32 %v435, %v607
    %v609 = vpop.f32.mrb[0].mxu0
    %610 = vmatprep.mubr.f32.mxu0 0.0
    %611 = vmatmul.mubr.f32.gmra.mrb[0].mxu0 %v475
    %v612 = vpop.f32.mrb[0].mxu0
    %v613 = vadd.f32 %v435, %v612
    %v614 = vpop.f32.mrb[0].mxu0
    %615 = vmatprep.mubr.f32.mxu0 0.0
    %616 = vmatmul.mubr.f32.gmra.mrb[0].mxu0 %v478
    %v617 = vpop.f32.mrb[0].mxu0
    %v618 = vadd.f32 %v435, %v617
    %v619 = vpop.f32.mrb[0].mxu0
    %620 = vmatprep.mubr.f32.mxu0 0.0
    %621 = vmatmul.mubr.f32.gmra.mrb[0].mxu0 %v481
    %v622 = vpop.f32.mrb[0].mxu0
    %v623 = vadd.f32 %v435, %v622
    %v624 = vpop.f32.mrb[0].mxu0
    %625 = vmatprep.mubr.f32.mxu0 0.0
    %626 = vmatmul.mubr.f32.gmra.mrb[0].mxu0 %v484
    %v627 = vpop.f32.mrb[0].mxu0
    %v628 = vadd.f32 %v435, %v627
    %v629 = vpop.f32.mrb[0].mxu0
    %630 = vdwg.mxu0
    %v631 = vmax.f32 %v553, 0.0
    %v632 = vmax.f32 %v558, 0.0
    %v633 = vmax.f32 %v563, 0.0
    %v634 = vmax.f32 %v568, 0.0
    %v635 = vmax.f32 %v573, 0.0
    %v636 = vmax.f32 %v578, 0.0
    %v637 = vmax.f32 %v583, 0.0
    %v638 = vmax.f32 %v588, 0.0
    %v639 = vmax.f32 %v593, 0.0
    %v640 = vmax.f32 %v598, 0.0
    %v641 = vmax.f32 %v603, 0.0
    %v642 = vmax.f32 %v608, 0.0
    %v643 = vmax.f32 %v613, 0.0
    %v644 = vmax.f32 %v618, 0.0
    %v645 = vmax.f32 %v623, 0.0
    %v646 = vmax.f32 %v628, 0.0
    %v647 = vld [vmem:[%s7] sm:$0x1]
    %v648 = vld [vmem:[#allocation2] sm:$0x1]
    %650 = vset.pattern.permute.xlu0 0
    %651 = vperm.xlu0 %650, %v648
    %v652 = vpop.permute.xlu0 %651
    %v654 = vlaneseq
    %v655 = vshrl.u32 %v654, 7
    %v656 = vsub.s32 0, %v655
    %v657 = vrot.slane %v652, %v656
    %vm658 = vcmask 261120
    %v660 = vsel %vm658, %v647, 0
    %v663 = vsel %vm658, %v631, 0
    %v666 = vsel %vm658, %v632, 0
    %v669 = vsel %vm658, %v633, 0
    %v672 = vsel %vm658, %v634, 0
    %v675 = vsel %vm658, %v635, 0
    %v678 = vsel %vm658, %v636, 0
    %v681 = vsel %vm658, %v637, 0
    %v684 = vsel %vm658, %v638, 0
    %v687 = vsel %vm658, %v639, 0
    %v690 = vsel %vm658, %v640, 0
    %v693 = vsel %vm658, %v641, 0
    %v696 = vsel %vm658, %v642, 0
    %v699 = vsel %vm658, %v643, 0
    %v702 = vsel %vm658, %v644, 0
    %v705 = vsel %vm658, %v645, 0
    %v708 = vsel %vm658, %v646, 0
    %710 = vmatprep.subr.mxu0 0.0
    %711 = vmatpush1.xpose.msra.mxu0 %v663
    %712 = vmatprep.subr.mxu0 0.0
    %713 = vmatpush1.xpose.msra.mxu0 %v666
    %714 = vmatprep.subr.mxu0 0.0
    %715 = vmatpush1.xpose.msra.mxu0 %v669
    %716 = vmatprep.subr.mxu0 0.0
    %717 = vmatpush1.xpose.msra.mxu0 %v672
    %718 = vmatprep.subr.mxu0 0.0
    %719 = vmatpush1.xpose.msra.mxu0 %v675
    %720 = vmatprep.subr.mxu0 0.0
    %721 = vmatpush1.xpose.msra.mxu0 %v678
    %722 = vmatprep.subr.mxu0 0.0
    %723 = vmatpush1.xpose.msra.mxu0 %v681
    %724 = vmatprep.subr.mxu0 0.0
    %725 = vmatpush1.xpose.msra.mxu0 %v684
    %726 = vmatprep.subr.mxu0 0.0
    %727 = vmatpush1.xpose.msra.mxu0 %v687
    %728 = vmatprep.subr.mxu0 0.0
    %729 = vmatpush1.xpose.msra.mxu0 %v690
    %730 = vmatprep.subr.mxu0 0.0
    %731 = vmatpush1.xpose.msra.mxu0 %v693
    %732 = vmatprep.subr.mxu0 0.0
    %733 = vmatpush1.xpose.msra.mxu0 %v696
    %734 = vmatprep.subr.mxu0 0.0
    %735 = vmatpush1.xpose.msra.mxu0 %v699
    %736 = vmatprep.subr.mxu0 0.0
    %737 = vmatpush1.xpose.msra.mxu0 %v702
    %738 = vmatprep.subr.mxu0 0.0
    %739 = vmatpush1.xpose.msra.mxu0 %v705
    %740 = vmatprep.subr.mxu0 0.0
    %741 = vmatpush1.xpose.msra.mxu0 %v708
    %742 = vmatprep.subr.mxu0 0.0
    %743 = vmatpush1.xpose.msra.mxu0 0.0
    %744 = vmatprep.subr.mxu0 0.0
    %745 = vmatpush1.xpose.msra.mxu0 0.0
    %746 = vmatprep.subr.mxu0 0.0
    %747 = vmatpush1.xpose.msra.mxu0 0.0
    %748 = vmatprep.subr.mxu0 0.0
    %749 = vmatpush1.xpose.msra.mxu0 0.0
    %750 = vmatprep.subr.mxu0 0.0
    %751 = vmatpush1.xpose.msra.mxu0 0.0
    %752 = vmatprep.subr.mxu0 0.0
    %753 = vmatpush1.xpose.msra.mxu0 0.0
    %754 = vmatprep.subr.mxu0 0.0
    %755 = vmatpush1.xpose.msra.mxu0 0.0
    %756 = vmatprep.subr.mxu0 0.0
    %757 = vmatpush1.xpose.msra.mxu0 0.0
    %758 = vmatprep.subr.mxu0 0.0
    %759 = vmatpush1.xpose.msra.mxu0 0.0
    %760 = vmatprep.subr.mxu0 0.0
    %761 = vmatpush1.xpose.msra.mxu0 0.0
    %762 = vmatprep.subr.mxu0 0.0
    %763 = vmatpush1.xpose.msra.mxu0 0.0
    %764 = vmatprep.subr.mxu0 0.0
    %765 = vmatpush1.xpose.msra.mxu0 0.0
    %766 = vmatprep.subr.mxu0 0.0
    %767 = vmatpush1.xpose.msra.mxu0 0.0
    %768 = vmatprep.subr.mxu0 0.0
    %769 = vmatpush1.xpose.msra.mxu0 0.0
    %770 = vmatprep.subr.mxu0 0.0
    %771 = vmatpush1.xpose.msra.mxu0 0.0
    %772 = vmatprep.subr.mxu0 0.0
    %773 = vmatpush1.xpose.msra.mxu0 0.0
    %774 = vmatprep.mubr.f32.mxu0 0.0
    %775 = vmatmul.mubr.f32.gmra.mrb[0].mxu0 %v660
    %v776 = vpop.f32.mrb[0].mxu0
    %v777 = vadd.f32 %v657, %v776
    %v778 = vpop.f32.mrb[0].mxu0
    %779 = vdwg.mxu0
    %780 = vst [vmem:[#allocation3] sm:$0x1] %v777
    // Predicated region
    $region38: #{tpu_custom_call.1} parent=1 // pred_check
      _
    $region39: #{tpu_custom_call.1} parent=1 // pred_check_branch
      %782 = sbr.rel (0) target = $region41
    $region40: #{tpu_custom_call.1} parent=1 // pred_region
      %s784 = ssub.s32 16, 16
      %785 = vsyncadd [#allocation4], %s784
      %s787 = sshll.u32 [#allocation3], 4
      %s788 = int_to_ptr.vmem [resolvable:$true] %s787
      %790 = dma.vmem_to_hbm [thread:$0]  %s788, 16, %s9, [#allocation4]
    $region41: #{tpu_custom_call.1} parent=1 // pred_fallthru
      _
    // Predicated region
    $region42: #{tpu_custom_call.1} parent=1 // pred_check
      _
    $region43: #{tpu_custom_call.1} parent=1 // pred_check_branch
      %792 = sbr.rel (0) target = $region45
    $region44: #{tpu_custom_call.1} parent=1 // pred_region
      %793 = dma.done [#allocation4], 16
    $region45: #{tpu_custom_call.1} parent=1 // pred_fallthru
      _
    %794 = vsyncpa [#allocation4], 1

</llo_original>
